<compile_context>
chip_gen: v7x
topology: tpu7x:2x2x1
jax: 0.10.0
libtpu: 0.0.40
codegen_flags: <defaults>
</compile_context>

<pallas_src>
import functools

import jax
import jax.numpy as jnp
from jax.experimental import pallas as pl
from jax.experimental.pallas import tpu as pltpu


# --------------------------------------------------------------------------- #
# Pallas kernel: fused MLP for one batch tile
#   out = relu(relu(x @ W1 + b1) @ W2 + b2) @ W3 + b3
# --------------------------------------------------------------------------- #
def _disc_mlp_kernel(s_ref, w1_ref, b1_ref, w2_ref, b2_ref, w3_ref, b3_ref, o_ref,
                     *, use_bf16):
    mxu_dt = jnp.bfloat16 if use_bf16 else jnp.float32

    def mm(a, w_ref):
        return jnp.dot(a.astype(mxu_dt), w_ref[...].astype(mxu_dt),
                       preferred_element_type=jnp.float32)

    x = s_ref[...]
    h1 = jnp.maximum(mm(x, w1_ref) + b1_ref[...], 0.0)       # bias/ReLU in f32
    h2 = jnp.maximum(mm(h1, w2_ref) + b2_ref[...], 0.0)
    out = mm(h2, w3_ref) + b3_ref[...]
    o_ref[...] = out.astype(o_ref.dtype)


def _round_up(x, m):
    return ((x + m - 1) // m) * m


@functools.partial(jax.jit, static_argnames=("block_b", "use_bf16"))
def discriminator_forward_pallas(s, w1, b1, w2, b2, w3, b3, *,
                                 block_b=2048, use_bf16=False):
    """s: [B, state_dim]; weights pre-transposed to [in, out]; biases [1, out]."""
    B, state_dim = s.shape
    assert w1.shape[0] == state_dim, "W1 must be pre-folded to [state_dim, 256]"
    h1_dim = w1.shape[1]
    h2_dim = w2.shape[1]
    z_dim = w3.shape[1]

    # Batch tile: multiple of 8 (f32 sublane), capped by block_b.
    block_b = _round_up(max(int(block_b), 8), 8)
    target_steps = 2  # so the parallel batch axis can span both v7x TensorCores
    if B >= 2 * 256:
        tb = min(block_b, _round_up(pl.cdiv(B, target_steps), 8))
    else:
        tb = min(block_b, _round_up(B, 8))
    tb = max(tb, 8)
    num_tiles = pl.cdiv(B, tb)  # ragged last block handled by Pallas (no jnp.pad)

    kernel = functools.partial(_disc_mlp_kernel, use_bf16=use_bf16)

    out = pl.pallas_call(
        kernel,
        out_shape=jax.ShapeDtypeStruct((B, z_dim), jnp.float32),
        grid_spec=pltpu.PrefetchScalarGridSpec(
            num_scalar_prefetch=0,
            grid=(num_tiles,),
            in_specs=[
                # batch-tiled activations
                pl.BlockSpec((tb, state_dim), lambda i: (i, 0)),
                # weights / biases: constant index_map -> VMEM-resident, DMA'd once
                pl.BlockSpec((state_dim, h1_dim), lambda i: (0, 0)),
                pl.BlockSpec((1, h1_dim), lambda i: (0, 0)),
                pl.BlockSpec((h1_dim, h2_dim), lambda i: (0, 0)),
                pl.BlockSpec((1, h2_dim), lambda i: (0, 0)),
                pl.BlockSpec((h2_dim, z_dim), lambda i: (0, 0)),
                pl.BlockSpec((1, z_dim), lambda i: (0, 0)),
            ],
            out_specs=pl.BlockSpec((tb, z_dim), lambda i: (i, 0)),
        ),
        compiler_params=pltpu.CompilerParams(
            dimension_semantics=("parallel",),     # shard batch grid across TCs
            vmem_limit_bytes=32 * 1024 * 1024,     # safe on v5e/v6e/v7x
        ),
    )(s, w1, b1, w2, b2, w3, b3)
    return out


# --------------------------------------------------------------------------- #
# Parameter setup (deterministic, synthetic) + spectral norm + featurizer fold
# --------------------------------------------------------------------------- #
_FEATURE_SLICES = {
    # env_name -> (start(state_dim), size)   matching Discriminator.featurizer
    "hopper": (lambda sd: sd - 6, 3),        # s[:, -6:-3]
    "fetch": (lambda sd: 0, 3),              # s[:, 0:3]
    "fetch_push": (lambda sd: 3, 2),         # s[:, 3:5]
    "finger": (lambda sd: 0, 3),             # s[:, 0:3]
}


def _linear_init(key, in_dim, out_dim):
    """Torch-style Linear init: U(-1/sqrt(in), 1/sqrt(in)). Weight is [out, in]."""
    kw, kb = jax.random.split(key)
    bound = 1.0 / jnp.sqrt(in_dim)
    w = jax.random.uniform(kw, (out_dim, in_dim), jnp.float32, -bound, bound)
    b = jax.random.uniform(kb, (out_dim,), jnp.float32, -bound, bound)
    return w, b


def _spectral_normalize(w, key, n_power_iterations=15, eps=1e-12):
    """Power-iteration estimate of the largest singular value; returns w / sigma."""
    u = jax.random.normal(key, (w.shape[0],), jnp.float32)
    u = u / (jnp.linalg.norm(u) + eps)
    v = jnp.zeros((w.shape[1],), jnp.float32)
    for _ in range(n_power_iterations):
        v = w.T @ u
        v = v / (jnp.linalg.norm(v) + eps)
        u = w @ v
        u = u / (jnp.linalg.norm(u) + eps)
    sigma = u @ (w @ v)
    return w / sigma


def make_discriminator_params(state_dim, z_dim, env_name="hopper", featurize=False,
                              seed=0):
    start_fn, feature_dim = _FEATURE_SLICES[env_name]
    feat_start = int(start_fn(state_dim))
    in_dim = feature_dim if featurize else state_dim

    key = jax.random.PRNGKey(seed)
    k1, k2, k3, ku2, ku3 = jax.random.split(key, 5)

    w1, b1 = _linear_init(k1, in_dim, 256)
    w2, b2 = _linear_init(k2, 256, 64)
    w3, b3 = _linear_init(k3, 64, z_dim)

    # spectral_norm parametrization on l2 and l3 (forward uses W / sigma)
    w2 = _spectral_normalize(w2, ku2)
    w3 = _spectral_normalize(w3, ku3)

    # Pre-transpose to [in, out]; biases reshaped to [1, out].
    w1_t = w1.T                                  # [in_dim, 256]
    if featurize:
        # Fold the featurizer column-slice into W1: zero rows outside the slice.
        w1_eff = jnp.zeros((state_dim, 256), jnp.float32)
        w1_eff = w1_eff.at[feat_start:feat_start + feature_dim, :].set(w1_t)
    else:
        w1_eff = w1_t                            # already [state_dim, 256]

    return dict(
        w1=w1_eff, b1=b1[None, :],
        w2=w2.T, b2=b2[None, :],
        w3=w3.T, b3=b3[None, :],
        # kept only for the pure-JAX reference (original, un-folded semantics)
        w1_orig=w1_t,
        env_name=env_name, featurize=featurize,
        feature_dim=feature_dim, feat_start=feat_start,
    )


def discriminator_forward(s, params, block_b=2048, use_bf16=False):
    """Full forward, matching Discriminator.forward (featurizer folded into W1)."""
    return discriminator_forward_pallas(
        s,
        params["w1"], params["b1"],
        params["w2"], params["b2"],
        params["w3"], params["b3"],
        block_b=block_b, use_bf16=use_bf16,
    )


# Pure-JAX reference implementing the ORIGINAL module semantics (explicit slice,
# un-folded W1) for correctness checks.
def discriminator_forward_ref(s, params):
    if params["featurize"]:
        st, sz = params["feat_start"], params["feature_dim"]
        x = s[:, st:st + sz]
    else:
        x = s
    h1 = jnp.maximum(x @ params["w1_orig"] + params["b1"], 0.0)
    h2 = jnp.maximum(h1 @ params["w2"] + params["b2"], 0.0)
    return h2 @ params["w3"] + params["b3"]


if __name__ == "__main__":
    state_dim, z_dim = 16, 4

    # Case 1: no featurizer, tiny batch (single grid step).
    params = make_discriminator_params(state_dim, z_dim, env_name="hopper",
                                       featurize=False, seed=0)
    s = jax.random.normal(jax.random.PRNGKey(0), (8, state_dim), jnp.float32)
    out = jax.block_until_ready(discriminator_forward(s, params))
    assert out.shape == (8, z_dim), out.shape
    ref = discriminator_forward_ref(s, params)
    assert jnp.allclose(out, ref, atol=1e-4, rtol=1e-4), "case-1 mismatch"

    # Case 2: batch not a multiple of the tile -> ragged last block, multi-step grid
    # (no host-side padding of the input).
    s2 = jax.random.normal(jax.random.PRNGKey(1), (300, state_dim), jnp.float32)
    out2 = jax.block_until_ready(discriminator_forward(s2, params, block_b=128))
    assert out2.shape == (300, z_dim), out2.shape
    ref2 = discriminator_forward_ref(s2, params)
    assert jnp.allclose(out2, ref2, atol=1e-4, rtol=1e-4), "case-2 mismatch"

    # Case 3: featurizer folded into W1 (hopper: s[:, -6:-3]); B >= 512 splits
    # into >=2 grid steps so the parallel axis can use both v7x TensorCores.
    params_f = make_discriminator_params(state_dim, z_dim, env_name="hopper",
                                         featurize=True, seed=1)
    s3 = jax.random.normal(jax.random.PRNGKey(2), (600, state_dim), jnp.float32)
    out3 = jax.block_until_ready(discriminator_forward(s3, params_f))
    assert out3.shape == (600, z_dim), out3.shape
    ref3 = discriminator_forward_ref(s3, params_f)
    assert jnp.allclose(out3, ref3, atol=1e-4, rtol=1e-4), "case-3 mismatch"

    # Case 4: bf16 MXU operands (f32 accumulate / bias / ReLU) — looser tolerance.
    out4 = jax.block_until_ready(discriminator_forward(s3, params_f, use_bf16=True))
    assert out4.shape == (600, z_dim), out4.shape
    assert jnp.allclose(out4, ref3, atol=3e-2, rtol=3e-2), "case-4 mismatch"

    print("KERNEL_OK")
</pallas_src>

<mosaic_0001>
module attributes {stable_mosaic.version = 11 : i64} {
  func.func @_disc_mlp_kernel(%arg0: i32, %arg1: memref<8x16xf32, #tpu.memory_space<vmem>>, %arg2: memref<16x256xf32, #tpu.memory_space<vmem>>, %arg3: memref<1x256xf32, #tpu.memory_space<vmem>>, %arg4: memref<256x64xf32, #tpu.memory_space<vmem>>, %arg5: memref<1x64xf32, #tpu.memory_space<vmem>>, %arg6: memref<64x4xf32, #tpu.memory_space<vmem>>, %arg7: memref<1x4xf32, #tpu.memory_space<vmem>>, %arg8: memref<8x4xf32, #tpu.memory_space<vmem>>) attributes {dimension_semantics = [#tpu.dimension_semantics<parallel>], iteration_bounds = array<i64: 1>, scalar_prefetch = 0 : i64, scratch_operands = 0 : i64, tpu.core_type = #tpu.core_type<tc>, window_params = [{transform_indices = @transform_0, window_bounds = array<i64: 8, 16>}, {pipeline_mode = #tpu.pipeline_mode<synchronous>, transform_indices = @transform_1, window_bounds = array<i64: 16, 256>}, {pipeline_mode = #tpu.pipeline_mode<synchronous>, transform_indices = @transform_2, window_bounds = array<i64: 1, 256>}, {pipeline_mode = #tpu.pipeline_mode<synchronous>, transform_indices = @transform_3, window_bounds = array<i64: 256, 64>}, {pipeline_mode = #tpu.pipeline_mode<synchronous>, transform_indices = @transform_4, window_bounds = array<i64: 1, 64>}, {pipeline_mode = #tpu.pipeline_mode<synchronous>, transform_indices = @transform_5, window_bounds = array<i64: 64, 4>}, {pipeline_mode = #tpu.pipeline_mode<synchronous>, transform_indices = @transform_6, window_bounds = array<i64: 1, 4>}, {transform_indices = @transform_7, window_bounds = array<i64: 8, 4>}]} {
    %c0 = arith.constant 0 : index
    %c0_0 = arith.constant 0 : index
    %0 = vector.load %arg1[%c0, %c0_0] : memref<8x16xf32, #tpu.memory_space<vmem>>, vector<8x16xf32>
    %c0_1 = arith.constant 0 : index
    %c0_2 = arith.constant 0 : index
    %1 = vector.load %arg2[%c0_1, %c0_2] : memref<16x256xf32, #tpu.memory_space<vmem>>, vector<16x256xf32>
    %cst = arith.constant dense<0.000000e+00> : vector<8x256xf32>
    %2 = tpu.matmul %0, %1, %cst {dimension_numbers = #tpu.dot_dimension_numbers<[1], [0], [0], [1], [0, 0, 1, 1], [], []>} : vector<8x16xf32>, vector<16x256xf32>, vector<8x256xf32> -> vector<8x256xf32>
    %c0_3 = arith.constant 0 : index
    %c0_4 = arith.constant 0 : index
    %3 = vector.load %arg3[%c0_3, %c0_4] : memref<1x256xf32, #tpu.memory_space<vmem>>, vector<1x256xf32>
    %4 = vector.broadcast %3 : vector<1x256xf32> to vector<8x256xf32>
    %5 = arith.addf %2, %4 : vector<8x256xf32>
    %cst_5 = arith.constant 0.000000e+00 : f32
    %6 = vector.broadcast %cst_5 : f32 to vector<8x256xf32>
    %7 = arith.maximumf %5, %6 : vector<8x256xf32>
    %c0_6 = arith.constant 0 : index
    %c0_7 = arith.constant 0 : index
    %8 = vector.load %arg4[%c0_6, %c0_7] : memref<256x64xf32, #tpu.memory_space<vmem>>, vector<256x64xf32>
    %cst_8 = arith.constant dense<0.000000e+00> : vector<8x64xf32>
    %9 = tpu.matmul %7, %8, %cst_8 {dimension_numbers = #tpu.dot_dimension_numbers<[1], [0], [0], [1], [0, 0, 1, 1], [], []>} : vector<8x256xf32>, vector<256x64xf32>, vector<8x64xf32> -> vector<8x64xf32>
    %c0_9 = arith.constant 0 : index
    %c0_10 = arith.constant 0 : index
    %10 = vector.load %arg5[%c0_9, %c0_10] : memref<1x64xf32, #tpu.memory_space<vmem>>, vector<1x64xf32>
    %11 = vector.broadcast %10 : vector<1x64xf32> to vector<8x64xf32>
    %12 = arith.addf %9, %11 : vector<8x64xf32>
    %cst_11 = arith.constant 0.000000e+00 : f32
    %13 = vector.broadcast %cst_11 : f32 to vector<8x64xf32>
    %14 = arith.maximumf %12, %13 : vector<8x64xf32>
    %c0_12 = arith.constant 0 : index
    %c0_13 = arith.constant 0 : index
    %15 = vector.load %arg6[%c0_12, %c0_13] : memref<64x4xf32, #tpu.memory_space<vmem>>, vector<64x4xf32>
    %cst_14 = arith.constant dense<0.000000e+00> : vector<8x4xf32>
    %16 = tpu.matmul %14, %15, %cst_14 {dimension_numbers = #tpu.dot_dimension_numbers<[1], [0], [0], [1], [0, 0, 1, 1], [], []>} : vector<8x64xf32>, vector<64x4xf32>, vector<8x4xf32> -> vector<8x4xf32>
    %c0_15 = arith.constant 0 : index
    %c0_16 = arith.constant 0 : index
    %17 = vector.load %arg7[%c0_15, %c0_16] : memref<1x4xf32, #tpu.memory_space<vmem>>, vector<1x4xf32>
    %18 = vector.broadcast %17 : vector<1x4xf32> to vector<8x4xf32>
    %19 = arith.addf %16, %18 : vector<8x4xf32>
    %c0_17 = arith.constant 0 : index
    %c0_18 = arith.constant 0 : index
    %20 = vector.load %arg8[%c0_17, %c0_18] : memref<8x4xf32, #tpu.memory_space<vmem>>, vector<8x4xf32>
    tpu.vector_store %arg8[%c0_17, %c0_18], %19 {strides = array<i32>} : memref<8x4xf32, #tpu.memory_space<vmem>>, vector<8x4xf32>,
    return
  }
  func.func @transform_0(%arg0: i32) -> (i32, i32) {
    %c0_i32 = arith.constant 0 : i32
    %c0_i32_0 = arith.constant 0 : i32
    return %arg0, %c0_i32 : i32, i32
  }
  func.func @transform_1(%arg0: i32) -> (i32, i32) {
    %c0_i32 = arith.constant 0 : i32
    %c0_i32_0 = arith.constant 0 : i32
    %c0_i32_1 = arith.constant 0 : i32
    return %c0_i32, %c0_i32_0 : i32, i32
  }
  func.func @transform_2(%arg0: i32) -> (i32, i32) {
    %c0_i32 = arith.constant 0 : i32
    %c0_i32_0 = arith.constant 0 : i32
    %c0_i32_1 = arith.constant 0 : i32
    return %c0_i32, %c0_i32_0 : i32, i32
  }
  func.func @transform_3(%arg0: i32) -> (i32, i32) {
    %c0_i32 = arith.constant 0 : i32
    %c0_i32_0 = arith.constant 0 : i32
    %c0_i32_1 = arith.constant 0 : i32
    return %c0_i32, %c0_i32_0 : i32, i32
  }
  func.func @transform_4(%arg0: i32) -> (i32, i32) {
    %c0_i32 = arith.constant 0 : i32
    %c0_i32_0 = arith.constant 0 : i32
    %c0_i32_1 = arith.constant 0 : i32
    return %c0_i32, %c0_i32_0 : i32, i32
  }
  func.func @transform_5(%arg0: i32) -> (i32, i32) {
    %c0_i32 = arith.constant 0 : i32
    %c0_i32_0 = arith.constant 0 : i32
    %c0_i32_1 = arith.constant 0 : i32
    return %c0_i32, %c0_i32_0 : i32, i32
  }
  func.func @transform_6(%arg0: i32) -> (i32, i32) {
    %c0_i32 = arith.constant 0 : i32
    %c0_i32_0 = arith.constant 0 : i32
    %c0_i32_1 = arith.constant 0 : i32
    return %c0_i32, %c0_i32_0 : i32, i32
  }
  func.func @transform_7(%arg0: i32) -> (i32, i32) {
    %c0_i32 = arith.constant 0 : i32
    %c0_i32_0 = arith.constant 0 : i32
    return %arg0, %c0_i32 : i32, i32
  }
}

</mosaic_0001>

<llo_original>
// kernel: discriminator_forward_pallas.1
$region0: #{discriminator_forward_pallas.1}
  #allocation0 [shape = 'u32[]', space=smem, size = 0x4, offset = 0x4, fixed_abs, tag = 'smem constant byte address 0x4 - core index']
  #allocation1 [shape = 'u32[144,128]{1,0:T(1,128)}', space=vmem, size = 0x12000, scoped, tag = 'internal scratch']
  %s0 = inlined_call_operand.vmem [shape: f32[8,16], index: 0, kind: input, shape index: {}]
  %s1 = inlined_call_operand.vmem [shape: f32[16,256], index: 1, kind: input, shape index: {}]
  %s2 = inlined_call_operand.vmem [shape: f32[1,256], index: 2, kind: input, shape index: {}]
  %s3 = inlined_call_operand.vmem [shape: f32[256,64], index: 3, kind: input, shape index: {}]
  %s4 = inlined_call_operand.vmem [shape: f32[1,64], index: 4, kind: input, shape index: {}]
  %s5 = inlined_call_operand.vmem [shape: f32[64,4], index: 5, kind: input, shape index: {}]
  %s6 = inlined_call_operand.vmem [shape: f32[1,4], index: 6, kind: input, shape index: {}]
  %s7 = inlined_call_operand.vmem [shape: f32[8,4], index: 7, kind: output, shape index: {}]
  %s8 = sld [smem:[#allocation0]]
  $region38: #{discriminator_forward_pallas.1} parent=0
    _
  %s10 = ssub.s32 1, %s8
  %s11 = scalar_select 0, %s10, %s8
  // Predicated region
  $region2: #{discriminator_forward_pallas.1} parent=0 // pred_check
    _
  $region3: #{discriminator_forward_pallas.1} parent=0 // pred_check_branch
    %13 = sbr.rel (0) target = $region5
  $region4: #{discriminator_forward_pallas.1} parent=0 // pred_region
    _
  $region5: #{discriminator_forward_pallas.1} parent=0 // pred_fallthru
    _
  // Predicated region
  $region6: #{discriminator_forward_pallas.1} parent=0 // pred_check
    _
  $region7: #{discriminator_forward_pallas.1} parent=0 // pred_check_branch
    %15 = sbr.rel (0) target = $region9
  $region8: #{discriminator_forward_pallas.1} parent=0 // pred_region
    _
  $region9: #{discriminator_forward_pallas.1} parent=0 // pred_fallthru
    _
  // Predicated region
  $region10: #{discriminator_forward_pallas.1} parent=0 // pred_check
    _
  $region11: #{discriminator_forward_pallas.1} parent=0 // pred_check_branch
    %17 = sbr.rel (0) target = $region13
  $region12: #{discriminator_forward_pallas.1} parent=0 // pred_region
    _
  $region13: #{discriminator_forward_pallas.1} parent=0 // pred_fallthru
    _
  // Predicated region
  $region14: #{discriminator_forward_pallas.1} parent=0 // pred_check
    _
  $region15: #{discriminator_forward_pallas.1} parent=0 // pred_check_branch
    %19 = sbr.rel (0) target = $region17
  $region16: #{discriminator_forward_pallas.1} parent=0 // pred_region
    _
  $region17: #{discriminator_forward_pallas.1} parent=0 // pred_fallthru
    _
  // Predicated region
  $region18: #{discriminator_forward_pallas.1} parent=0 // pred_check
    _
  $region19: #{discriminator_forward_pallas.1} parent=0 // pred_check_branch
    %21 = sbr.rel (0) target = $region21
  $region20: #{discriminator_forward_pallas.1} parent=0 // pred_region
    _
  $region21: #{discriminator_forward_pallas.1} parent=0 // pred_fallthru
    _
  // Predicated region
  $region22: #{discriminator_forward_pallas.1} parent=0 // pred_check
    _
  $region23: #{discriminator_forward_pallas.1} parent=0 // pred_check_branch
    %23 = sbr.rel (0) target = $region25
  $region24: #{discriminator_forward_pallas.1} parent=0 // pred_region
    _
  $region25: #{discriminator_forward_pallas.1} parent=0 // pred_fallthru
    _
  // Predicated region
  $region26: #{discriminator_forward_pallas.1} parent=0 // pred_check
    _
  $region27: #{discriminator_forward_pallas.1} parent=0 // pred_check_branch
    %25 = sbr.rel (0) target = $region29
  $region28: #{discriminator_forward_pallas.1} parent=0 // pred_region
    _
  $region29: #{discriminator_forward_pallas.1} parent=0 // pred_fallthru
    _
  %v26 = vld [vmem:[%s0] sm:$0xff]
  %v27 = vld [vmem:[%s1] sm:$0xff]
  %v28 = vld [vmem:[%s1 + $0x8] sm:$0xff]
  %v29 = vld [vmem:[%s1 + $0x10] sm:$0xff]
  %v30 = vld [vmem:[%s1 + $0x18] sm:$0xff]
  %v31 = vld [vmem:[%s2] sm:$0x3]
  %v33 = vlaneseq
  %v34 = vshrl.u32 %v33, 7
  %v35 = vsub.s32 0, %v34
  %v36 = vrot.slane %v31, %v35
  %v37 = vlaneseq
  %v38 = vshrl.u32 %v37, 7
  %v39 = vsub.s32 1, %v38
  %v40 = vrot.slane %v31, %v39
  %vm43 = vcmask 130048
  %v45 = vsel %vm43, %v26, 0
  %47 = vmatprep.subr.mxu0 %v28
  %48 = vmatpush1.msra.mxu0 %v27
  %49 = vmatprep.subr.mxu0 %v30
  %50 = vmatpush1.msra.mxu0 %v29
  %51 = vmatprep.subr.mxu0 0.0
  %52 = vmatpush1.msra.mxu0 0.0
  %53 = vmatprep.subr.mxu0 0.0
  %54 = vmatpush1.msra.mxu0 0.0
  %55 = vmatprep.subr.mxu0 0.0
  %56 = vmatpush1.msra.mxu0 0.0
  %57 = vmatprep.subr.mxu0 0.0
  %58 = vmatpush1.msra.mxu0 0.0
  %59 = vmatprep.subr.mxu0 0.0
  %60 = vmatpush1.msra.mxu0 0.0
  %61 = vmatprep.subr.mxu0 0.0
  %62 = vmatpush1.msra.mxu0 0.0
  %63 = vmatprep.subr.mxu0 0.0
  %64 = vmatpush1.msra.mxu0 0.0
  %65 = vmatprep.subr.mxu0 0.0
  %66 = vmatpush1.msra.mxu0 0.0
  %67 = vmatprep.subr.mxu0 0.0
  %68 = vmatpush1.msra.mxu0 0.0
  %69 = vmatprep.subr.mxu0 0.0
  %70 = vmatpush1.msra.mxu0 0.0
  %71 = vmatprep.subr.mxu0 0.0
  %72 = vmatpush1.msra.mxu0 0.0
  %73 = vmatprep.subr.mxu0 0.0
  %74 = vmatpush1.msra.mxu0 0.0
  %75 = vmatprep.subr.mxu0 0.0
  %76 = vmatpush1.msra.mxu0 0.0
  %77 = vmatprep.subr.mxu0 0.0
  %78 = vmatpush1.msra.mxu0 0.0
  %79 = vmatprep.subr.mxu0 0.0
  %80 = vmatpush1.msra.mxu0 0.0
  %81 = vmatprep.subr.mxu0 0.0
  %82 = vmatpush1.msra.mxu0 0.0
  %83 = vmatprep.subr.mxu0 0.0
  %84 = vmatpush1.msra.mxu0 0.0
  %85 = vmatprep.subr.mxu0 0.0
  %86 = vmatpush1.msra.mxu0 0.0
  %87 = vmatprep.subr.mxu0 0.0
  %88 = vmatpush1.msra.mxu0 0.0
  %89 = vmatprep.subr.mxu0 0.0
  %90 = vmatpush1.msra.mxu0 0.0
  %91 = vmatprep.subr.mxu0 0.0
  %92 = vmatpush1.msra.mxu0 0.0
  %93 = vmatprep.subr.mxu0 0.0
  %94 = vmatpush1.msra.mxu0 0.0
  %95 = vmatprep.subr.mxu0 0.0
  %96 = vmatpush1.msra.mxu0 0.0
  %97 = vmatprep.subr.mxu0 0.0
  %98 = vmatpush1.msra.mxu0 0.0
  %99 = vmatprep.subr.mxu0 0.0
  %100 = vmatpush1.msra.mxu0 0.0
  %101 = vmatprep.subr.mxu0 0.0
  %102 = vmatpush1.msra.mxu0 0.0
  %103 = vmatprep.subr.mxu0 0.0
  %104 = vmatpush1.msra.mxu0 0.0
  %105 = vmatprep.subr.mxu0 0.0
  %106 = vmatpush1.msra.mxu0 0.0
  %107 = vmatprep.subr.mxu0 0.0
  %108 = vmatpush1.msra.mxu0 0.0
  %109 = vmatprep.subr.mxu0 0.0
  %110 = vmatpush1.msra.mxu0 0.0
  %111 = vmatprep.mubr.f32.mxu0 0.0
  %112 = vmatmul.mubr.f32.gmra.mrb[0].mxu0 %v45
  %v113 = vpop.f32.mrb[0].mxu0
  %v114 = vadd.f32 %v36, %v113
  %v115 = vpop.f32.mrb[0].mxu0
  %v116 = vadd.f32 %v40, %v115
  %117 = vdwg.mxu0
  %v118 = vmax.f32 %v114, 0.0
  %v119 = vmax.f32 %v116, 0.0
  %v120 = vld [vmem:[%s3] sm:$0xff]
  %v121 = vld [vmem:[%s3 + $0x8] sm:$0xff]
  %v122 = vld [vmem:[%s3 + $0x10] sm:$0xff]
  %v123 = vld [vmem:[%s3 + $0x18] sm:$0xff]
  %v124 = vld [vmem:[%s3 + $0x20] sm:$0xff]
  %v125 = vld [vmem:[%s3 + $0x28] sm:$0xff]
  %v126 = vld [vmem:[%s3 + $0x30] sm:$0xff]
  %v127 = vld [vmem:[%s3 + $0x38] sm:$0xff]
  %v128 = vld [vmem:[%s3 + $0x40] sm:$0xff]
  %v129 = vld [vmem:[%s3 + $0x48] sm:$0xff]
  %v130 = vld [vmem:[%s3 + $0x50] sm:$0xff]
  %v131 = vld [vmem:[%s3 + $0x58] sm:$0xff]
  %v132 = vld [vmem:[%s3 + $0x60] sm:$0xff]
  %v133 = vld [vmem:[%s3 + $0x68] sm:$0xff]
  %v134 = vld [vmem:[%s3 + $0x70] sm:$0xff]
  %v135 = vld [vmem:[%s3 + $0x78] sm:$0xff]
  %v136 = vld [vmem:[%s3 + $0x80] sm:$0xff]
  %v137 = vld [vmem:[%s3 + $0x88] sm:$0xff]
  %v138 = vld [vmem:[%s3 + $0x90] sm:$0xff]
  %v139 = vld [vmem:[%s3 + $0x98] sm:$0xff]
  %v140 = vld [vmem:[%s3 + $0xa0] sm:$0xff]
  %v141 = vld [vmem:[%s3 + $0xa8] sm:$0xff]
  %v142 = vld [vmem:[%s3 + $0xb0] sm:$0xff]
  %v143 = vld [vmem:[%s3 + $0xb8] sm:$0xff]
  %v144 = vld [vmem:[%s3 + $0xc0] sm:$0xff]
  %v145 = vld [vmem:[%s3 + $0xc8] sm:$0xff]
  %v146 = vld [vmem:[%s3 + $0xd0] sm:$0xff]
  %v147 = vld [vmem:[%s3 + $0xd8] sm:$0xff]
  %v148 = vld [vmem:[%s3 + $0xe0] sm:$0xff]
  %v149 = vld [vmem:[%s3 + $0xe8] sm:$0xff]
  %v150 = vld [vmem:[%s3 + $0xf0] sm:$0xff]
  %v151 = vld [vmem:[%s3 + $0xf8] sm:$0xff]
  %v152 = vld [vmem:[%s4] sm:$0x1]
  %v154 = vlaneseq
  %v155 = vshrl.u32 %v154, 7
  %v156 = vsub.s32 0, %v155
  %v157 = vrot.slane %v152, %v156
  %159 = vmatprep.subr.mxu0 0.0
  %160 = vmatpush1.msra.mxu0 %v120
  %161 = vmatprep.subr.mxu0 0.0
  %162 = vmatpush1.msra.mxu0 %v121
  %163 = vmatprep.subr.mxu0 0.0
  %164 = vmatpush1.msra.mxu0 %v122
  %165 = vmatprep.subr.mxu0 0.0
  %166 = vmatpush1.msra.mxu0 %v123
  %167 = vmatprep.subr.mxu0 0.0
  %168 = vmatpush1.msra.mxu0 %v124
  %169 = vmatprep.subr.mxu0 0.0
  %170 = vmatpush1.msra.mxu0 %v125
  %171 = vmatprep.subr.mxu0 0.0
  %172 = vmatpush1.msra.mxu0 %v126
  %173 = vmatprep.subr.mxu0 0.0
  %174 = vmatpush1.msra.mxu0 %v127
  %175 = vmatprep.subr.mxu0 0.0
  %176 = vmatpush1.msra.mxu0 %v128
  %177 = vmatprep.subr.mxu0 0.0
  %178 = vmatpush1.msra.mxu0 %v129
  %179 = vmatprep.subr.mxu0 0.0
  %180 = vmatpush1.msra.mxu0 %v130
  %181 = vmatprep.subr.mxu0 0.0
  %182 = vmatpush1.msra.mxu0 %v131
  %183 = vmatprep.subr.mxu0 0.0
  %184 = vmatpush1.msra.mxu0 %v132
  %185 = vmatprep.subr.mxu0 0.0
  %186 = vmatpush1.msra.mxu0 %v133
  %187 = vmatprep.subr.mxu0 0.0
  %188 = vmatpush1.msra.mxu0 %v134
  %189 = vmatprep.subr.mxu0 0.0
  %190 = vmatpush1.msra.mxu0 %v135
  %191 = vmatprep.subr.mxu0 0.0
  %192 = vmatpush1.msra.mxu0 %v136
  %193 = vmatprep.subr.mxu0 0.0
  %194 = vmatpush1.msra.mxu0 %v137
  %195 = vmatprep.subr.mxu0 0.0
  %196 = vmatpush1.msra.mxu0 %v138
  %197 = vmatprep.subr.mxu0 0.0
  %198 = vmatpush1.msra.mxu0 %v139
  %199 = vmatprep.subr.mxu0 0.0
  %200 = vmatpush1.msra.mxu0 %v140
  %201 = vmatprep.subr.mxu0 0.0
  %202 = vmatpush1.msra.mxu0 %v141
  %203 = vmatprep.subr.mxu0 0.0
  %204 = vmatpush1.msra.mxu0 %v142
  %205 = vmatprep.subr.mxu0 0.0
  %206 = vmatpush1.msra.mxu0 %v143
  %207 = vmatprep.subr.mxu0 0.0
  %208 = vmatpush1.msra.mxu0 %v144
  %209 = vmatprep.subr.mxu0 0.0
  %210 = vmatpush1.msra.mxu0 %v145
  %211 = vmatprep.subr.mxu0 0.0
  %212 = vmatpush1.msra.mxu0 %v146
  %213 = vmatprep.subr.mxu0 0.0
  %214 = vmatpush1.msra.mxu0 %v147
  %215 = vmatprep.subr.mxu0 0.0
  %216 = vmatpush1.msra.mxu0 %v148
  %217 = vmatprep.subr.mxu0 0.0
  %218 = vmatpush1.msra.mxu0 %v149
  %219 = vmatprep.subr.mxu0 0.0
  %220 = vmatpush1.msra.mxu0 %v150
  %221 = vmatprep.subr.mxu0 0.0
  %222 = vmatpush1.msra.mxu0 %v151
  %223 = vmatprep.mubr.f32.mxu0 %v119
  %224 = vmatmul.mubr.f32.gmra.mrb[0].mxu0 %v118
  %v225 = vpop.f32.mrb[0].mxu0
  %v226 = vadd.f32 %v157, %v225
  %v227 = vpop.f32.mrb[0].mxu0
  %228 = vdwg.mxu0
  %v229 = vmax.f32 %v226, 0.0
  %v230 = vld [vmem:[%s5] sm:$0xff]
  %v231 = vld [vmem:[%s5 + $0x8] sm:$0xff]
  %v232 = vld [vmem:[%s5 + $0x10] sm:$0xff]
  %v233 = vld [vmem:[%s5 + $0x18] sm:$0xff]
  %v234 = vld [vmem:[%s5 + $0x20] sm:$0xff]
  %v235 = vld [vmem:[%s5 + $0x28] sm:$0xff]
  %v236 = vld [vmem:[%s5 + $0x30] sm:$0xff]
  %v237 = vld [vmem:[%s5 + $0x38] sm:$0xff]
  %v238 = vld [vmem:[%s6] sm:$0x1]
  %v240 = vlaneseq
  %v241 = vshrl.u32 %v240, 7
  %v242 = vsub.s32 0, %v241
  %v243 = vrot.slane %v238, %v242
  %vm245 = vcmask 523264
  %v247 = vsel %vm245, %v229, 0
  %249 = vmatprep.subr.mxu0 0.0
  %250 = vmatpush1.msra.mxu0 %v230
  %251 = vmatprep.subr.mxu0 0.0
  %252 = vmatpush1.msra.mxu0 %v231
  %253 = vmatprep.subr.mxu0 0.0
  %254 = vmatpush1.msra.mxu0 %v232
  %255 = vmatprep.subr.mxu0 0.0
  %256 = vmatpush1.msra.mxu0 %v233
  %257 = vmatprep.subr.mxu0 0.0
  %258 = vmatpush1.msra.mxu0 %v234
  %259 = vmatprep.subr.mxu0 0.0
  %260 = vmatpush1.msra.mxu0 %v235
  %261 = vmatprep.subr.mxu0 0.0
  %262 = vmatpush1.msra.mxu0 %v236
  %263 = vmatprep.subr.mxu0 0.0
  %264 = vmatpush1.msra.mxu0 %v237
  %265 = vmatprep.subr.mxu0 0.0
  %266 = vmatpush1.msra.mxu0 0.0
  %267 = vmatprep.subr.mxu0 0.0
  %268 = vmatpush1.msra.mxu0 0.0
  %269 = vmatprep.subr.mxu0 0.0
  %270 = vmatpush1.msra.mxu0 0.0
  %271 = vmatprep.subr.mxu0 0.0
  %272 = vmatpush1.msra.mxu0 0.0
  %273 = vmatprep.subr.mxu0 0.0
  %274 = vmatpush1.msra.mxu0 0.0
  %275 = vmatprep.subr.mxu0 0.0
  %276 = vmatpush1.msra.mxu0 0.0
  %277 = vmatprep.subr.mxu0 0.0
  %278 = vmatpush1.msra.mxu0 0.0
  %279 = vmatprep.subr.mxu0 0.0
  %280 = vmatpush1.msra.mxu0 0.0
  %281 = vmatprep.subr.mxu0 0.0
  %282 = vmatpush1.msra.mxu0 0.0
  %283 = vmatprep.subr.mxu0 0.0
  %284 = vmatpush1.msra.mxu0 0.0
  %285 = vmatprep.subr.mxu0 0.0
  %286 = vmatpush1.msra.mxu0 0.0
  %287 = vmatprep.subr.mxu0 0.0
  %288 = vmatpush1.msra.mxu0 0.0
  %289 = vmatprep.subr.mxu0 0.0
  %290 = vmatpush1.msra.mxu0 0.0
  %291 = vmatprep.subr.mxu0 0.0
  %292 = vmatpush1.msra.mxu0 0.0
  %293 = vmatprep.subr.mxu0 0.0
  %294 = vmatpush1.msra.mxu0 0.0
  %295 = vmatprep.subr.mxu0 0.0
  %296 = vmatpush1.msra.mxu0 0.0
  %297 = vmatprep.subr.mxu0 0.0
  %298 = vmatpush1.msra.mxu0 0.0
  %299 = vmatprep.subr.mxu0 0.0
  %300 = vmatpush1.msra.mxu0 0.0
  %301 = vmatprep.subr.mxu0 0.0
  %302 = vmatpush1.msra.mxu0 0.0
  %303 = vmatprep.subr.mxu0 0.0
  %304 = vmatpush1.msra.mxu0 0.0
  %305 = vmatprep.subr.mxu0 0.0
  %306 = vmatpush1.msra.mxu0 0.0
  %307 = vmatprep.subr.mxu0 0.0
  %308 = vmatpush1.msra.mxu0 0.0
  %309 = vmatprep.subr.mxu0 0.0
  %310 = vmatpush1.msra.mxu0 0.0
  %311 = vmatprep.subr.mxu0 0.0
  %312 = vmatpush1.msra.mxu0 0.0
  %313 = vmatprep.mubr.f32.mxu0 0.0
  %314 = vmatmul.mubr.f32.gmra.mrb[0].mxu0 %v247
  %v315 = vpop.f32.mrb[0].mxu0
  %v316 = vadd.f32 %v243, %v315
  %v317 = vpop.f32.mrb[0].mxu0
  %318 = vdwg.mxu0
  %vm319 = vcmask 31744
  %320 = vst.msk [vmem:[%s7] sm:$0xff] %vm319, %v316
  // Predicated region
  $region30: #{discriminator_forward_pallas.1} parent=0 // pred_check
    _
  $region31: #{discriminator_forward_pallas.1} parent=0 // pred_check_branch
    %322 = sbr.rel (0) target = $region33
  $region32: #{discriminator_forward_pallas.1} parent=0 // pred_region
    _
  $region33: #{discriminator_forward_pallas.1} parent=0 // pred_fallthru
    _
  // Predicated region
  $region34: #{discriminator_forward_pallas.1} parent=0 // pred_check
    _
  $region35: #{discriminator_forward_pallas.1} parent=0 // pred_check_branch
    %324 = sbr.rel (0) target = $region37
  $region36: #{discriminator_forward_pallas.1} parent=0 // pred_region
    _
  $region37: #{discriminator_forward_pallas.1} parent=0 // pred_fallthru
    _

</llo_original>
